<compile_context>
chip_gen: v7x
topology: tpu7x:2x2x1
jax: 0.10.0
libtpu: 0.0.40
codegen_flags: <defaults>
</compile_context>

<pallas_src>
import functools

import jax
import jax.numpy as jnp
from jax.experimental import pallas as pl
from jax.experimental.pallas import tpu as pltpu

OBS_DIM = 2      # MountainCarContinuous observation_space.shape[0]
ACT_DIM = 1      # MountainCarContinuous action_space.shape[0]
IN_DIM = OBS_DIM + ACT_DIM
HIDDEN = 64

CB = 128         # rows per in-kernel chunk: (CB, HIDDEN) f32 == 16 live vregs


def critic_kernel(s_ref, a_ref, w1_ref, b1_ref, w23_ref, b23_ref, o_ref):
    """One batch tile.

    s_ref:   (TB, OBS_DIM)    batch-major state tile (partial rows may be garbage)
    a_ref:   (TB, ACT_DIM)    batch-major action tile
    w1_ref:  (IN_DIM, HIDDEN) first-layer weight  (resident across the grid)
    b1_ref:  (1, HIDDEN)      first-layer bias    (resident)
    w23_ref: (1, HIDDEN)      fused (W2 @ W3)^T   (resident)
    b23_ref: (1, 1)           fused bias b2 @ W3 + b3
    o_ref:   (TB, 1)          q-values for this tile
    """
    tb = o_ref.shape[0]
    n_chunks = tb // CB                    # static; TB is always a multiple of CB

    # Hoist the tiny resident weights out of the chunk loop.
    w1 = w1_ref[...]                       # (IN_DIM, HIDDEN)
    b1 = b1_ref[...]                       # (1, HIDDEN)
    w23 = w23_ref[...]                     # (1, HIDDEN)
    b23 = b23_ref[...]                     # (1, 1)

    # Rolled loop over 128-row chunks bounds live vregs (no spills) regardless
    # of how large TB is made to amortize per-grid-step overhead.
    @pl.loop(0, n_chunks)
    def _(c):
        off = pl.multiple_of(c * CB, CB)
        s_c = s_ref[pl.ds(off, CB), :]     # (CB, OBS_DIM)
        a_c = a_ref[pl.ds(off, CB), :]     # (CB, ACT_DIM)

        # Layer 1 on the VPU: IN_DIM (=3) broadcast FMAs. A K=3 matmul would
        # waste the MXU and add MXU push/pop latency for no benefit.
        h = s_c[:, 0:1] * w1[0:1, :]
        for i in range(1, OBS_DIM):
            h = h + s_c[:, i:i + 1] * w1[i:i + 1, :]
        for j in range(ACT_DIM):
            k = OBS_DIM + j
            h = h + a_c[:, j:j + 1] * w1[k:k + 1, :]
        h = jnp.maximum(h + b1, 0.0)       # (CB, HIDDEN)

        # Fused layers 2+3: elementwise mul (VPU) + lane reduction (XLU).
        q = jnp.sum(h * w23, axis=-1, keepdims=True) + b23     # (CB, 1)
        o_ref[pl.ds(off, CB), :] = q.astype(o_ref.dtype)


def _round_up(x, m):
    return (x + m - 1) // m * m


def init_params(key):
    """Deterministic init mimicking PyTorch nn.Linear default (U[-1/sqrt(fan_in), +1/sqrt(fan_in)])."""
    ks = jax.random.split(key, 6)

    def lin(kw, kb, fan_in, fan_out):
        bound = 1.0 / jnp.sqrt(jnp.float32(fan_in))
        w = jax.random.uniform(kw, (fan_in, fan_out), jnp.float32, -bound, bound)
        b = jax.random.uniform(kb, (1, fan_out), jnp.float32, -bound, bound)
        return w, b

    w1, b1 = lin(ks[0], ks[1], IN_DIM, HIDDEN)
    w2, b2 = lin(ks[2], ks[3], HIDDEN, HIDDEN)
    w3, b3 = lin(ks[4], ks[5], HIDDEN, 1)
    return (w1, b1, w2, b2, w3, b3)


@functools.partial(jax.jit, static_argnames=("tile_b",))
def critic_forward(state, action, params, *, tile_b=2048):
    """state: (B, OBS_DIM), action: (B, ACT_DIM)  ->  q: (B,)"""
    w1, b1, w2, b2, w3, b3 = params
    B = state.shape[0]

    # --- exact algebraic fusion of layers 2 and 3 (no activation between) ---
    hp = jax.lax.Precision.HIGHEST
    w23_row = jnp.dot(w2, w3, precision=hp).T          # (1, HIDDEN)
    b23 = jnp.dot(b2, w3, precision=hp) + b3           # (1, 1)

    state = state.astype(jnp.float32)
    action = action.astype(jnp.float32)

    # --- batch tile selection ------------------------------------------------
    # Big tiles amortize per-step overhead; once B is large enough, cap the
    # tile at ceil(B/2) so the "parallel" grid has >= 2 steps (both v7x TCs
    # get work).  Tiles are always a multiple of CB so the in-kernel chunk
    # loop is uniform; the last grid block may be partial -- no host padding.
    tile_b = max(CB, _round_up(int(tile_b), CB))
    if B <= 2 * CB:
        tb = CB
    else:
        tb = min(tile_b, _round_up(-(-B // 2), CB))
    grid = (pl.cdiv(B, tb),)

    # VMEM note: each (tb, few-lane) block pads its minor dim to 128 lanes, so
    # the double-buffered footprint is ~6 * tb * 512 B (~6 MiB at tb=2048) --
    # well under default scoped VMEM on v5e/v6e/v7x.  Re-check (or set
    # vmem_limit_bytes) before pushing tile_b past ~4096.
    resident = lambda i: (0, 0)

    cost = pl.CostEstimate(
        flops=int(B * (2 * IN_DIM * HIDDEN + 3 * HIDDEN)),
        transcendentals=0,
        bytes_accessed=int(4 * (B * (IN_DIM + 1) + IN_DIM * HIDDEN + 2 * HIDDEN + 1)),
    )

    q2d = pl.pallas_call(
        critic_kernel,
        out_shape=jax.ShapeDtypeStruct((B, 1), jnp.float32),
        grid=grid,
        in_specs=[
            pl.BlockSpec((tb, OBS_DIM), lambda i: (i, 0)),
            pl.BlockSpec((tb, ACT_DIM), lambda i: (i, 0)),
            pl.BlockSpec((IN_DIM, HIDDEN), resident),
            pl.BlockSpec((1, HIDDEN), resident),
            pl.BlockSpec((1, HIDDEN), resident),
            pl.BlockSpec((1, 1), resident),
        ],
        out_specs=pl.BlockSpec((tb, 1), lambda i: (i, 0)),
        compiler_params=pltpu.CompilerParams(
            dimension_semantics=("parallel",),
        ),
        cost_estimate=cost,
    )(state, action, w1, b1, w23_row, b23)

    # torch.squeeze(q, -1)   ((B,1) -> (B,) is a free reshape)
    return q2d[:, 0]


def critic_reference(state, action, params):
    w1, b1, w2, b2, w3, b3 = params
    x = jnp.concatenate([state, action], axis=-1).astype(jnp.float32)
    h1 = jnp.maximum(x @ w1 + b1, 0.0)
    h2 = h1 @ w2 + b2
    q = h2 @ w3 + b3
    return jnp.squeeze(q, axis=-1)


if __name__ == "__main__":
    key = jax.random.PRNGKey(0)
    k_params, k_s1, k_a1, k_s2, k_a2 = jax.random.split(key, 5)
    params = init_params(k_params)

    # Small-batch path (single partial tile; typical RL minibatch).
    B = 8
    state = jax.random.normal(k_s1, (B, OBS_DIM), jnp.float32)
    action = jax.random.normal(k_a1, (B, ACT_DIM), jnp.float32)
    q = jax.block_until_ready(critic_forward(state, action, params))
    q_ref = jax.block_until_ready(critic_reference(state, action, params))
    assert q.shape == (B,), f"bad output shape: {q.shape}"
    assert jnp.allclose(q, q_ref, atol=1e-4, rtol=1e-4), "mismatch vs reference (B=8)"

    # Multi-tile path: 2 "parallel" grid steps (v7x both-TC split) + a partial
    # last block (no host-side padding).
    B2 = 300
    state2 = jax.random.normal(k_s2, (B2, OBS_DIM), jnp.float32)
    action2 = jax.random.normal(k_a2, (B2, ACT_DIM), jnp.float32)
    q2 = jax.block_until_ready(critic_forward(state2, action2, params))
    q2_ref = jax.block_until_ready(critic_reference(state2, action2, params))
    assert q2.shape == (B2,), f"bad output shape: {q2.shape}"
    assert jnp.allclose(q2, q2_ref, atol=1e-4, rtol=1e-4), "mismatch vs reference (B=300)"

    print("KERNEL_OK")
</pallas_src>

<mosaic_0001>
module attributes {stable_mosaic.version = 11 : i64} {
  func.func @critic_kernel(%arg0: i32, %arg1: memref<128x2xf32, #tpu.memory_space<vmem>>, %arg2: memref<128x1xf32, #tpu.memory_space<vmem>>, %arg3: memref<3x64xf32, #tpu.memory_space<vmem>>, %arg4: memref<1x64xf32, #tpu.memory_space<vmem>>, %arg5: memref<1x64xf32, #tpu.memory_space<vmem>>, %arg6: memref<1x1xf32, #tpu.memory_space<vmem>>, %arg7: memref<128x1xf32, #tpu.memory_space<vmem>>) attributes {dimension_semantics = [#tpu.dimension_semantics<parallel>], iteration_bounds = array<i64: 1>, scalar_prefetch = 0 : i64, scratch_operands = 0 : i64, tpu.core_type = #tpu.core_type<tc>, window_params = [{transform_indices = @transform_0, window_bounds = array<i64: 128, 2>}, {transform_indices = @transform_1, window_bounds = array<i64: 128, 1>}, {pipeline_mode = #tpu.pipeline_mode<synchronous>, transform_indices = @transform_2, window_bounds = array<i64: 3, 64>}, {pipeline_mode = #tpu.pipeline_mode<synchronous>, transform_indices = @transform_3, window_bounds = array<i64: 1, 64>}, {pipeline_mode = #tpu.pipeline_mode<synchronous>, transform_indices = @transform_4, window_bounds = array<i64: 1, 64>}, {pipeline_mode = #tpu.pipeline_mode<synchronous>, transform_indices = @transform_5, window_bounds = array<i64: 1, 1>}, {transform_indices = @transform_6, window_bounds = array<i64: 128, 1>}]} {
    %c0 = arith.constant 0 : index
    %c0_0 = arith.constant 0 : index
    %0 = vector.load %arg3[%c0, %c0_0] : memref<3x64xf32, #tpu.memory_space<vmem>>, vector<3x64xf32>
    %c0_1 = arith.constant 0 : index
    %c0_2 = arith.constant 0 : index
    %1 = vector.load %arg4[%c0_1, %c0_2] : memref<1x64xf32, #tpu.memory_space<vmem>>, vector<1x64xf32>
    %c0_3 = arith.constant 0 : index
    %c0_4 = arith.constant 0 : index
    %2 = vector.load %arg5[%c0_3, %c0_4] : memref<1x64xf32, #tpu.memory_space<vmem>>, vector<1x64xf32>
    %c0_5 = arith.constant 0 : index
    %c0_6 = arith.constant 0 : index
    %3 = vector.load %arg6[%c0_5, %c0_6] : memref<1x1xf32, #tpu.memory_space<vmem>>, vector<1x1xf32>
    %c0_i32 = arith.constant 0 : i32
    %c1_i32 = arith.constant 1 : i32
    %4 = arith.muli %c0_i32, %c1_i32 : i32
    %c0_i32_7 = arith.constant 0 : i32
    %5 = arith.addi %c0_i32_7, %4 : i32
    %c128_i32 = arith.constant 128 : i32
    %6 = arith.muli %5, %c128_i32 : i32
    %7 = tpu.assume_multiple %6, 128 : i32
    %8 = arith.index_cast %7 : i32 to index
    %c0_8 = arith.constant 0 : index
    %9 = vector.load %arg1[%8, %c0_8] : memref<128x2xf32, #tpu.memory_space<vmem>>, vector<128x2xf32>
    %10 = arith.index_cast %7 : i32 to index
    %c0_9 = arith.constant 0 : index
    %11 = vector.load %arg2[%10, %c0_9] : memref<128x1xf32, #tpu.memory_space<vmem>>, vector<128x1xf32>
    %12 = vector.extract_strided_slice %9 {offsets = [0, 0], sizes = [128, 1], strides = [1, 1]} : vector<128x2xf32> to vector<128x1xf32>
    %13 = vector.extract_strided_slice %0 {offsets = [0, 0], sizes = [1, 64], strides = [1, 1]} : vector<3x64xf32> to vector<1x64xf32>
    %14 = vector.broadcast %12 : vector<128x1xf32> to vector<128x64xf32>
    %15 = vector.broadcast %13 : vector<1x64xf32> to vector<128x64xf32>
    %16 = arith.mulf %14, %15 : vector<128x64xf32>
    %17 = vector.extract_strided_slice %9 {offsets = [0, 1], sizes = [128, 1], strides = [1, 1]} : vector<128x2xf32> to vector<128x1xf32>
    %18 = vector.extract_strided_slice %0 {offsets = [1, 0], sizes = [1, 64], strides = [1, 1]} : vector<3x64xf32> to vector<1x64xf32>
    %19 = vector.broadcast %17 : vector<128x1xf32> to vector<128x64xf32>
    %20 = vector.broadcast %18 : vector<1x64xf32> to vector<128x64xf32>
    %21 = arith.mulf %19, %20 : vector<128x64xf32>
    %22 = arith.addf %16, %21 : vector<128x64xf32>
    %23 = vector.extract_strided_slice %0 {offsets = [2, 0], sizes = [1, 64], strides = [1, 1]} : vector<3x64xf32> to vector<1x64xf32>
    %24 = vector.broadcast %11 : vector<128x1xf32> to vector<128x64xf32>
    %25 = vector.broadcast %23 : vector<1x64xf32> to vector<128x64xf32>
    %26 = arith.mulf %24, %25 : vector<128x64xf32>
    %27 = arith.addf %22, %26 : vector<128x64xf32>
    %28 = vector.broadcast %1 : vector<1x64xf32> to vector<128x64xf32>
    %29 = arith.addf %27, %28 : vector<128x64xf32>
    %cst = arith.constant 0.000000e+00 : f32
    %30 = vector.broadcast %cst : f32 to vector<128x64xf32>
    %31 = arith.maximumf %29, %30 : vector<128x64xf32>
    %32 = vector.broadcast %2 : vector<1x64xf32> to vector<128x64xf32>
    %33 = arith.mulf %31, %32 : vector<128x64xf32>
    %cst_10 = arith.constant dense<0.000000e+00> : vector<128xf32>
    %34 = vector.multi_reduction <add>, %33, %cst_10 [1] : vector<128x64xf32> to vector<128xf32>
    %35 = vector.shape_cast %34 : vector<128xf32> to vector<128x1xf32>
    %36 = vector.broadcast %3 : vector<1x1xf32> to vector<128x1xf32>
    %37 = arith.addf %35, %36 : vector<128x1xf32>
    %38 = arith.index_cast %7 : i32 to index
    %c0_11 = arith.constant 0 : index
    %39 = vector.load %arg7[%38, %c0_11] : memref<128x1xf32, #tpu.memory_space<vmem>>, vector<128x1xf32>
    tpu.vector_store %arg7[%38, %c0_11], %37 {strides = array<i32>} : memref<128x1xf32, #tpu.memory_space<vmem>>, vector<128x1xf32>,
    %c1_i32_12 = arith.constant 1 : i32
    return
  }
  func.func @transform_0(%arg0: i32) -> (i32, i32) {
    %c0_i32 = arith.constant 0 : i32
    %c0_i32_0 = arith.constant 0 : i32
    return %arg0, %c0_i32 : i32, i32
  }
  func.func @transform_1(%arg0: i32) -> (i32, i32) {
    %c0_i32 = arith.constant 0 : i32
    %c0_i32_0 = arith.constant 0 : i32
    return %arg0, %c0_i32 : i32, i32
  }
  func.func @transform_2(%arg0: i32) -> (i32, i32) {
    %c0_i32 = arith.constant 0 : i32
    %c0_i32_0 = arith.constant 0 : i32
    %c0_i32_1 = arith.constant 0 : i32
    return %c0_i32, %c0_i32_0 : i32, i32
  }
  func.func @transform_3(%arg0: i32) -> (i32, i32) {
    %c0_i32 = arith.constant 0 : i32
    %c0_i32_0 = arith.constant 0 : i32
    %c0_i32_1 = arith.constant 0 : i32
    return %c0_i32, %c0_i32_0 : i32, i32
  }
  func.func @transform_4(%arg0: i32) -> (i32, i32) {
    %c0_i32 = arith.constant 0 : i32
    %c0_i32_0 = arith.constant 0 : i32
    %c0_i32_1 = arith.constant 0 : i32
    return %c0_i32, %c0_i32_0 : i32, i32
  }
  func.func @transform_5(%arg0: i32) -> (i32, i32) {
    %c0_i32 = arith.constant 0 : i32
    %c0_i32_0 = arith.constant 0 : i32
    %c0_i32_1 = arith.constant 0 : i32
    return %c0_i32, %c0_i32_0 : i32, i32
  }
  func.func @transform_6(%arg0: i32) -> (i32, i32) {
    %c0_i32 = arith.constant 0 : i32
    %c0_i32_0 = arith.constant 0 : i32
    return %arg0, %c0_i32 : i32, i32
  }
}

</mosaic_0001>

<llo_original>
// kernel: critic_forward.1
$region0: #{critic_forward.1}
  #allocation0 [shape = 'u32[]', space=smem, size = 0x4, offset = 0x4, fixed_abs, tag = 'smem constant byte address 0x4 - core index']
  #allocation1 [shape = 'u32[144,128]{1,0:T(1,128)}', space=vmem, size = 0x12000, scoped, tag = 'internal scratch']
  #allocation2 [shape = 'f32[1,1]{1,0:T(1,128)S(1)}', space=vmem, size = 0x200, scoped, tag = 'scoped memory for critic_forward.1']
  %s0 = inlined_call_operand.vmem [shape: f32[8,2], index: 0, kind: input, shape index: {}]
  %s1 = inlined_call_operand.vmem [shape: f32[8,1], index: 1, kind: input, shape index: {}]
  %s2 = inlined_call_operand.vmem [shape: f32[3,64], index: 2, kind: input, shape index: {}]
  %s3 = inlined_call_operand.vmem [shape: f32[1,64], index: 3, kind: input, shape index: {}]
  %s4 = inlined_call_operand.vmem [shape: f32[1,64], index: 4, kind: input, shape index: {}]
  %s5 = inlined_call_operand.<no memory space> [shape: f32[1,1], index: 5, kind: input, shape index: {}]
  %s6 = inlined_call_operand.vmem [shape: f32[8,1], index: 6, kind: output, shape index: {}]
  %s7 = sld [smem:[#allocation0]]
  $region68: #{critic_forward.1} parent=0
    _
  %s9 = ssub.s32 1, %s7
  %s10 = scalar_select 0, %s9, %s7
  %v11 = vstv %s5
  %12 = vst [vmem:[#allocation2] sm:$0x1] %v11
  $region1: #{critic_forward.1} parent=0
    #allocation3 [shape = 'u8[65536]{0}', space=vmem, size = 0x10000, scoped, tag = 'output window, operand 0, single buffered']
    // Predicated region
    $region2: #{critic_forward.1} parent=1 // pred_check
      _
    $region3: #{critic_forward.1} parent=1 // pred_check_branch
      %14 = sbr.rel (0) target = $region5
    $region4: #{critic_forward.1} parent=1 // pred_region
      _
    $region5: #{critic_forward.1} parent=1 // pred_fallthru
      _
    // Predicated region
    $region6: #{critic_forward.1} parent=1 // pred_check
      _
    $region7: #{critic_forward.1} parent=1 // pred_check_branch
      %16 = sbr.rel (0) target = $region9
    $region8: #{critic_forward.1} parent=1 // pred_region
      _
    $region9: #{critic_forward.1} parent=1 // pred_fallthru
      _
    // Predicated region
    $region10: #{critic_forward.1} parent=1 // pred_check
      _
    $region11: #{critic_forward.1} parent=1 // pred_check_branch
      %18 = sbr.rel (0) target = $region13
    $region12: #{critic_forward.1} parent=1 // pred_region
      _
    $region13: #{critic_forward.1} parent=1 // pred_fallthru
      _
    // Predicated region
    $region14: #{critic_forward.1} parent=1 // pred_check
      _
    $region15: #{critic_forward.1} parent=1 // pred_check_branch
      %20 = sbr.rel (0) target = $region17
    $region16: #{critic_forward.1} parent=1 // pred_region
      _
    $region17: #{critic_forward.1} parent=1 // pred_fallthru
      _
    // Predicated region
    $region18: #{critic_forward.1} parent=1 // pred_check
      _
    $region19: #{critic_forward.1} parent=1 // pred_check_branch
      %22 = sbr.rel (0) target = $region21
    $region20: #{critic_forward.1} parent=1 // pred_region
      _
    $region21: #{critic_forward.1} parent=1 // pred_fallthru
      _
    // Predicated region
    $region22: #{critic_forward.1} parent=1 // pred_check
      _
    $region23: #{critic_forward.1} parent=1 // pred_check_branch
      %24 = sbr.rel (0) target = $region25
    $region24: #{critic_forward.1} parent=1 // pred_region
      _
    $region25: #{critic_forward.1} parent=1 // pred_fallthru
      _
    %v25 = vld [vmem:[%s2] sm:$0x7]
    %v26 = vld [vmem:[%s3] sm:$0x1]
    %v27 = vld [vmem:[%s4] sm:$0x1]
    %v28 = vld [vmem:[#allocation2] sm:$0x1]
    %v29 = vld [vmem:[%s0] sm:$0xff]
    %v30 = vld [vmem:[%s0 + $0x8] sm:$0xff]
    %v31 = vld [vmem:[%s0 + $0x10] sm:$0xff]
    %v32 = vld [vmem:[%s0 + $0x18] sm:$0xff]
    %v33 = vld [vmem:[%s0 + $0x20] sm:$0xff]
    %v34 = vld [vmem:[%s0 + $0x28] sm:$0xff]
    %v35 = vld [vmem:[%s0 + $0x30] sm:$0xff]
    %v36 = vld [vmem:[%s0 + $0x38] sm:$0xff]
    %v37 = vld [vmem:[%s0 + $0x40] sm:$0xff]
    %v38 = vld [vmem:[%s0 + $0x48] sm:$0xff]
    %v39 = vld [vmem:[%s0 + $0x50] sm:$0xff]
    %v40 = vld [vmem:[%s0 + $0x58] sm:$0xff]
    %v41 = vld [vmem:[%s0 + $0x60] sm:$0xff]
    %v42 = vld [vmem:[%s0 + $0x68] sm:$0xff]
    %v43 = vld [vmem:[%s0 + $0x70] sm:$0xff]
    %v44 = vld [vmem:[%s0 + $0x78] sm:$0xff]
    %v45 = vld [vmem:[%s1] sm:$0xff]
    %v46 = vld [vmem:[%s1 + $0x8] sm:$0xff]
    %v47 = vld [vmem:[%s1 + $0x10] sm:$0xff]
    %v48 = vld [vmem:[%s1 + $0x18] sm:$0xff]
    %v49 = vld [vmem:[%s1 + $0x20] sm:$0xff]
    %v50 = vld [vmem:[%s1 + $0x28] sm:$0xff]
    %v51 = vld [vmem:[%s1 + $0x30] sm:$0xff]
    %v52 = vld [vmem:[%s1 + $0x38] sm:$0xff]
    %v53 = vld [vmem:[%s1 + $0x40] sm:$0xff]
    %v54 = vld [vmem:[%s1 + $0x48] sm:$0xff]
    %v55 = vld [vmem:[%s1 + $0x50] sm:$0xff]
    %v56 = vld [vmem:[%s1 + $0x58] sm:$0xff]
    %v57 = vld [vmem:[%s1 + $0x60] sm:$0xff]
    %v58 = vld [vmem:[%s1 + $0x68] sm:$0xff]
    %v59 = vld [vmem:[%s1 + $0x70] sm:$0xff]
    %v60 = vld [vmem:[%s1 + $0x78] sm:$0xff]
    %62 = vset.pattern.permute.xlu0 0
    %63 = vperm.xlu0 %62, %v29
    %v64 = vpop.permute.xlu0 %63
    %67 = vset.pattern.permute.xlu0 0
    %68 = vperm.xlu0 %67, %v30
    %v69 = vpop.permute.xlu0 %68
    %72 = vset.pattern.permute.xlu0 0
    %73 = vperm.xlu0 %72, %v31
    %v74 = vpop.permute.xlu0 %73
    %77 = vset.pattern.permute.xlu0 0
    %78 = vperm.xlu0 %77, %v32
    %v79 = vpop.permute.xlu0 %78
    %82 = vset.pattern.permute.xlu0 0
    %83 = vperm.xlu0 %82, %v33
    %v84 = vpop.permute.xlu0 %83
    %87 = vset.pattern.permute.xlu0 0
    %88 = vperm.xlu0 %87, %v34
    %v89 = vpop.permute.xlu0 %88
    %92 = vset.pattern.permute.xlu0 0
    %93 = vperm.xlu0 %92, %v35
    %v94 = vpop.permute.xlu0 %93
    %97 = vset.pattern.permute.xlu0 0
    %98 = vperm.xlu0 %97, %v36
    %v99 = vpop.permute.xlu0 %98
    %102 = vset.pattern.permute.xlu0 0
    %103 = vperm.xlu0 %102, %v37
    %v104 = vpop.permute.xlu0 %103
    %107 = vset.pattern.permute.xlu0 0
    %108 = vperm.xlu0 %107, %v38
    %v109 = vpop.permute.xlu0 %108
    %112 = vset.pattern.permute.xlu0 0
    %113 = vperm.xlu0 %112, %v39
    %v114 = vpop.permute.xlu0 %113
    %117 = vset.pattern.permute.xlu0 0
    %118 = vperm.xlu0 %117, %v40
    %v119 = vpop.permute.xlu0 %118
    %122 = vset.pattern.permute.xlu0 0
    %123 = vperm.xlu0 %122, %v41
    %v124 = vpop.permute.xlu0 %123
    %127 = vset.pattern.permute.xlu0 0
    %128 = vperm.xlu0 %127, %v42
    %v129 = vpop.permute.xlu0 %128
    %132 = vset.pattern.permute.xlu0 0
    %133 = vperm.xlu0 %132, %v43
    %v134 = vpop.permute.xlu0 %133
    %137 = vset.pattern.permute.xlu0 0
    %138 = vperm.xlu0 %137, %v44
    %v139 = vpop.permute.xlu0 %138
    %v141 = vlaneseq
    %v142 = vshrl.u32 %v141, 7
    %v143 = vsub.s32 0, %v142
    %v144 = vrot.slane %v25, %v143
    %v145 = vmul.f32 %v64, %v144
    %v146 = vmul.f32 %v69, %v144
    %v147 = vmul.f32 %v74, %v144
    %v148 = vmul.f32 %v79, %v144
    %v149 = vmul.f32 %v84, %v144
    %v150 = vmul.f32 %v89, %v144
    %v151 = vmul.f32 %v94, %v144
    %v152 = vmul.f32 %v99, %v144
    %v153 = vmul.f32 %v104, %v144
    %v154 = vmul.f32 %v109, %v144
    %v155 = vmul.f32 %v114, %v144
    %v156 = vmul.f32 %v119, %v144
    %v157 = vmul.f32 %v124, %v144
    %v158 = vmul.f32 %v129, %v144
    %v159 = vmul.f32 %v134, %v144
    %v160 = vmul.f32 %v139, %v144
    %161 = vset.pattern.permute.xlu0 1
    %162 = vperm.xlu0 %161, %v29
    %v163 = vpop.permute.xlu0 %162
    %165 = vset.pattern.permute.xlu0 1
    %166 = vperm.xlu0 %165, %v30
    %v167 = vpop.permute.xlu0 %166
    %169 = vset.pattern.permute.xlu0 1
    %170 = vperm.xlu0 %169, %v31
    %v171 = vpop.permute.xlu0 %170
    %173 = vset.pattern.permute.xlu0 1
    %174 = vperm.xlu0 %173, %v32
    %v175 = vpop.permute.xlu0 %174
    %177 = vset.pattern.permute.xlu0 1
    %178 = vperm.xlu0 %177, %v33
    %v179 = vpop.permute.xlu0 %178
    %181 = vset.pattern.permute.xlu0 1
    %182 = vperm.xlu0 %181, %v34
    %v183 = vpop.permute.xlu0 %182
    %185 = vset.pattern.permute.xlu0 1
    %186 = vperm.xlu0 %185, %v35
    %v187 = vpop.permute.xlu0 %186
    %189 = vset.pattern.permute.xlu0 1
    %190 = vperm.xlu0 %189, %v36
    %v191 = vpop.permute.xlu0 %190
    %193 = vset.pattern.permute.xlu0 1
    %194 = vperm.xlu0 %193, %v37
    %v195 = vpop.permute.xlu0 %194
    %197 = vset.pattern.permute.xlu0 1
    %198 = vperm.xlu0 %197, %v38
    %v199 = vpop.permute.xlu0 %198
    %201 = vset.pattern.permute.xlu0 1
    %202 = vperm.xlu0 %201, %v39
    %v203 = vpop.permute.xlu0 %202
    %205 = vset.pattern.permute.xlu0 1
    %206 = vperm.xlu0 %205, %v40
    %v207 = vpop.permute.xlu0 %206
    %209 = vset.pattern.permute.xlu0 1
    %210 = vperm.xlu0 %209, %v41
    %v211 = vpop.permute.xlu0 %210
    %213 = vset.pattern.permute.xlu0 1
    %214 = vperm.xlu0 %213, %v42
    %v215 = vpop.permute.xlu0 %214
    %217 = vset.pattern.permute.xlu0 1
    %218 = vperm.xlu0 %217, %v43
    %v219 = vpop.permute.xlu0 %218
    %221 = vset.pattern.permute.xlu0 1
    %222 = vperm.xlu0 %221, %v44
    %v223 = vpop.permute.xlu0 %222
    %v225 = vlaneseq
    %v226 = vshrl.u32 %v225, 7
    %v227 = vsub.s32 1, %v226
    %v228 = vrot.slane %v25, %v227
    %v229 = vmul.f32 %v163, %v228
    %v230 = vmul.f32 %v167, %v228
    %v231 = vmul.f32 %v171, %v228
    %v232 = vmul.f32 %v175, %v228
    %v233 = vmul.f32 %v179, %v228
    %v234 = vmul.f32 %v183, %v228
    %v235 = vmul.f32 %v187, %v228
    %v236 = vmul.f32 %v191, %v228
    %v237 = vmul.f32 %v195, %v228
    %v238 = vmul.f32 %v199, %v228
    %v239 = vmul.f32 %v203, %v228
    %v240 = vmul.f32 %v207, %v228
    %v241 = vmul.f32 %v211, %v228
    %v242 = vmul.f32 %v215, %v228
    %v243 = vmul.f32 %v219, %v228
    %v244 = vmul.f32 %v223, %v228
    %v245 = vadd.f32 %v145, %v229
    %v246 = vadd.f32 %v146, %v230
    %v247 = vadd.f32 %v147, %v231
    %v248 = vadd.f32 %v148, %v232
    %v249 = vadd.f32 %v149, %v233
    %v250 = vadd.f32 %v150, %v234
    %v251 = vadd.f32 %v151, %v235
    %v252 = vadd.f32 %v152, %v236
    %v253 = vadd.f32 %v153, %v237
    %v254 = vadd.f32 %v154, %v238
    %v255 = vadd.f32 %v155, %v239
    %v256 = vadd.f32 %v156, %v240
    %v257 = vadd.f32 %v157, %v241
    %v258 = vadd.f32 %v158, %v242
    %v259 = vadd.f32 %v159, %v243
    %v260 = vadd.f32 %v160, %v244
    %262 = vset.pattern.permute.xlu0 0
    %263 = vperm.xlu0 %262, %v45
    %v264 = vpop.permute.xlu0 %263
    %267 = vset.pattern.permute.xlu0 0
    %268 = vperm.xlu0 %267, %v46
    %v269 = vpop.permute.xlu0 %268
    %272 = vset.pattern.permute.xlu0 0
    %273 = vperm.xlu0 %272, %v47
    %v274 = vpop.permute.xlu0 %273
    %277 = vset.pattern.permute.xlu0 0
    %278 = vperm.xlu0 %277, %v48
    %v279 = vpop.permute.xlu0 %278
    %282 = vset.pattern.permute.xlu0 0
    %283 = vperm.xlu0 %282, %v49
    %v284 = vpop.permute.xlu0 %283
    %287 = vset.pattern.permute.xlu0 0
    %288 = vperm.xlu0 %287, %v50
    %v289 = vpop.permute.xlu0 %288
    %292 = vset.pattern.permute.xlu0 0
    %293 = vperm.xlu0 %292, %v51
    %v294 = vpop.permute.xlu0 %293
    %297 = vset.pattern.permute.xlu0 0
    %298 = vperm.xlu0 %297, %v52
    %v299 = vpop.permute.xlu0 %298
    %302 = vset.pattern.permute.xlu0 0
    %303 = vperm.xlu0 %302, %v53
    %v304 = vpop.permute.xlu0 %303
    %307 = vset.pattern.permute.xlu0 0
    %308 = vperm.xlu0 %307, %v54
    %v309 = vpop.permute.xlu0 %308
    %312 = vset.pattern.permute.xlu0 0
    %313 = vperm.xlu0 %312, %v55
    %v314 = vpop.permute.xlu0 %313
    %317 = vset.pattern.permute.xlu0 0
    %318 = vperm.xlu0 %317, %v56
    %v319 = vpop.permute.xlu0 %318
    %322 = vset.pattern.permute.xlu0 0
    %323 = vperm.xlu0 %322, %v57
    %v324 = vpop.permute.xlu0 %323
    %327 = vset.pattern.permute.xlu0 0
    %328 = vperm.xlu0 %327, %v58
    %v329 = vpop.permute.xlu0 %328
    %332 = vset.pattern.permute.xlu0 0
    %333 = vperm.xlu0 %332, %v59
    %v334 = vpop.permute.xlu0 %333
    %337 = vset.pattern.permute.xlu0 0
    %338 = vperm.xlu0 %337, %v60
    %v339 = vpop.permute.xlu0 %338
    %v341 = vlaneseq
    %v342 = vshrl.u32 %v341, 7
    %v343 = vsub.s32 2, %v342
    %v344 = vrot.slane %v25, %v343
    %v345 = vmul.f32 %v264, %v344
    %v346 = vmul.f32 %v269, %v344
    %v347 = vmul.f32 %v274, %v344
    %v348 = vmul.f32 %v279, %v344
    %v349 = vmul.f32 %v284, %v344
    %v350 = vmul.f32 %v289, %v344
    %v351 = vmul.f32 %v294, %v344
    %v352 = vmul.f32 %v299, %v344
    %v353 = vmul.f32 %v304, %v344
    %v354 = vmul.f32 %v309, %v344
    %v355 = vmul.f32 %v314, %v344
    %v356 = vmul.f32 %v319, %v344
    %v357 = vmul.f32 %v324, %v344
    %v358 = vmul.f32 %v329, %v344
    %v359 = vmul.f32 %v334, %v344
    %v360 = vmul.f32 %v339, %v344
    %v361 = vadd.f32 %v245, %v345
    %v362 = vadd.f32 %v246, %v346
    %v363 = vadd.f32 %v247, %v347
    %v364 = vadd.f32 %v248, %v348
    %v365 = vadd.f32 %v249, %v349
    %v366 = vadd.f32 %v250, %v350
    %v367 = vadd.f32 %v251, %v351
    %v368 = vadd.f32 %v252, %v352
    %v369 = vadd.f32 %v253, %v353
    %v370 = vadd.f32 %v254, %v354
    %v371 = vadd.f32 %v255, %v355
    %v372 = vadd.f32 %v256, %v356
    %v373 = vadd.f32 %v257, %v357
    %v374 = vadd.f32 %v258, %v358
    %v375 = vadd.f32 %v259, %v359
    %v376 = vadd.f32 %v260, %v360
    %v378 = vlaneseq
    %v379 = vshrl.u32 %v378, 7
    %v380 = vsub.s32 0, %v379
    %v381 = vrot.slane %v26, %v380
    %v383 = vadd.f32 %v361, %v381
    %v384 = vadd.f32 %v362, %v381
    %v385 = vadd.f32 %v363, %v381
    %v386 = vadd.f32 %v364, %v381
    %v387 = vadd.f32 %v365, %v381
    %v388 = vadd.f32 %v366, %v381
    %v389 = vadd.f32 %v367, %v381
    %v390 = vadd.f32 %v368, %v381
    %v391 = vadd.f32 %v369, %v381
    %v392 = vadd.f32 %v370, %v381
    %v393 = vadd.f32 %v371, %v381
    %v394 = vadd.f32 %v372, %v381
    %v395 = vadd.f32 %v373, %v381
    %v396 = vadd.f32 %v374, %v381
    %v397 = vadd.f32 %v375, %v381
    %v398 = vadd.f32 %v376, %v381
    %v399 = vmax.f32 %v383, 0.0
    %v400 = vmax.f32 %v384, 0.0
    %v401 = vmax.f32 %v385, 0.0
    %v402 = vmax.f32 %v386, 0.0
    %v403 = vmax.f32 %v387, 0.0
    %v404 = vmax.f32 %v388, 0.0
    %v405 = vmax.f32 %v389, 0.0
    %v406 = vmax.f32 %v390, 0.0
    %v407 = vmax.f32 %v391, 0.0
    %v408 = vmax.f32 %v392, 0.0
    %v409 = vmax.f32 %v393, 0.0
    %v410 = vmax.f32 %v394, 0.0
    %v411 = vmax.f32 %v395, 0.0
    %v412 = vmax.f32 %v396, 0.0
    %v413 = vmax.f32 %v397, 0.0
    %v414 = vmax.f32 %v398, 0.0
    %v416 = vlaneseq
    %v417 = vshrl.u32 %v416, 7
    %v418 = vsub.s32 0, %v417
    %v419 = vrot.slane %v27, %v418
    %v421 = vmul.f32 %v399, %v419
    %v422 = vmul.f32 %v400, %v419
    %v423 = vmul.f32 %v401, %v419
    %v424 = vmul.f32 %v402, %v419
    %v425 = vmul.f32 %v403, %v419
    %v426 = vmul.f32 %v404, %v419
    %v427 = vmul.f32 %v405, %v419
    %v428 = vmul.f32 %v406, %v419
    %v429 = vmul.f32 %v407, %v419
    %v430 = vmul.f32 %v408, %v419
    %v431 = vmul.f32 %v409, %v419
    %v432 = vmul.f32 %v410, %v419
    %v433 = vmul.f32 %v411, %v419
    %v434 = vmul.f32 %v412, %v419
    %v435 = vmul.f32 %v413, %v419
    %v436 = vmul.f32 %v414, %v419
    %vm437 = vcmask 523264
    %v438 = vsel %vm437, %v421, 0.0
    %439 = vadd.xlane.f32.xlu0 %v438
    %v440 = vpop.xlane.xlu0 %439
    %v441 = vsel %vm437, %v422, 0.0
    %442 = vadd.xlane.f32.xlu0 %v441
    %v443 = vpop.xlane.xlu0 %442
    %v444 = vsel %vm437, %v423, 0.0
    %445 = vadd.xlane.f32.xlu0 %v444
    %v446 = vpop.xlane.xlu0 %445
    %v447 = vsel %vm437, %v424, 0.0
    %448 = vadd.xlane.f32.xlu0 %v447
    %v449 = vpop.xlane.xlu0 %448
    %v450 = vsel %vm437, %v425, 0.0
    %451 = vadd.xlane.f32.xlu0 %v450
    %v452 = vpop.xlane.xlu0 %451
    %v453 = vsel %vm437, %v426, 0.0
    %454 = vadd.xlane.f32.xlu0 %v453
    %v455 = vpop.xlane.xlu0 %454
    %v456 = vsel %vm437, %v427, 0.0
    %457 = vadd.xlane.f32.xlu0 %v456
    %v458 = vpop.xlane.xlu0 %457
    %v459 = vsel %vm437, %v428, 0.0
    %460 = vadd.xlane.f32.xlu0 %v459
    %v461 = vpop.xlane.xlu0 %460
    %v462 = vsel %vm437, %v429, 0.0
    %463 = vadd.xlane.f32.xlu0 %v462
    %v464 = vpop.xlane.xlu0 %463
    %v465 = vsel %vm437, %v430, 0.0
    %466 = vadd.xlane.f32.xlu0 %v465
    %v467 = vpop.xlane.xlu0 %466
    %v468 = vsel %vm437, %v431, 0.0
    %469 = vadd.xlane.f32.xlu0 %v468
    %v470 = vpop.xlane.xlu0 %469
    %v471 = vsel %vm437, %v432, 0.0
    %472 = vadd.xlane.f32.xlu0 %v471
    %v473 = vpop.xlane.xlu0 %472
    %v474 = vsel %vm437, %v433, 0.0
    %475 = vadd.xlane.f32.xlu0 %v474
    %v476 = vpop.xlane.xlu0 %475
    %v477 = vsel %vm437, %v434, 0.0
    %478 = vadd.xlane.f32.xlu0 %v477
    %v479 = vpop.xlane.xlu0 %478
    %v480 = vsel %vm437, %v435, 0.0
    %481 = vadd.xlane.f32.xlu0 %v480
    %v482 = vpop.xlane.xlu0 %481
    %v483 = vsel %vm437, %v436, 0.0
    %484 = vadd.xlane.f32.xlu0 %v483
    %v485 = vpop.xlane.xlu0 %484
    %v487 = vlaneseq
    %v488 = vshrl.u32 %v487, 7
    %v489 = vsub.s32 0, %v488
    %v490 = vrot.slane %v28, %v489
    %v492 = vadd.f32 %v440, %v490
    %v493 = vadd.f32 %v443, %v490
    %v494 = vadd.f32 %v446, %v490
    %v495 = vadd.f32 %v449, %v490
    %v496 = vadd.f32 %v452, %v490
    %v497 = vadd.f32 %v455, %v490
    %v498 = vadd.f32 %v458, %v490
    %v499 = vadd.f32 %v461, %v490
    %v500 = vadd.f32 %v464, %v490
    %v501 = vadd.f32 %v467, %v490
    %v502 = vadd.f32 %v470, %v490
    %v503 = vadd.f32 %v473, %v490
    %v504 = vadd.f32 %v476, %v490
    %v505 = vadd.f32 %v479, %v490
    %v506 = vadd.f32 %v482, %v490
    %v507 = vadd.f32 %v485, %v490
    %vm508 = vcmask 7168
    %509 = vst.msk [vmem:[#allocation3] sm:$0xff] %vm508, %v492
    %510 = vst.msk [vmem:[#allocation3 + $0x8] sm:$0xff] %vm508, %v493
    %511 = vst.msk [vmem:[#allocation3 + $0x10] sm:$0xff] %vm508, %v494
    %512 = vst.msk [vmem:[#allocation3 + $0x18] sm:$0xff] %vm508, %v495
    %513 = vst.msk [vmem:[#allocation3 + $0x20] sm:$0xff] %vm508, %v496
    %514 = vst.msk [vmem:[#allocation3 + $0x28] sm:$0xff] %vm508, %v497
    %515 = vst.msk [vmem:[#allocation3 + $0x30] sm:$0xff] %vm508, %v498
    %516 = vst.msk [vmem:[#allocation3 + $0x38] sm:$0xff] %vm508, %v499
    %517 = vst.msk [vmem:[#allocation3 + $0x40] sm:$0xff] %vm508, %v500
    %518 = vst.msk [vmem:[#allocation3 + $0x48] sm:$0xff] %vm508, %v501
    %519 = vst.msk [vmem:[#allocation3 + $0x50] sm:$0xff] %vm508, %v502
    %520 = vst.msk [vmem:[#allocation3 + $0x58] sm:$0xff] %vm508, %v503
    %521 = vst.msk [vmem:[#allocation3 + $0x60] sm:$0xff] %vm508, %v504
    %522 = vst.msk [vmem:[#allocation3 + $0x68] sm:$0xff] %vm508, %v505
    %523 = vst.msk [vmem:[#allocation3 + $0x70] sm:$0xff] %vm508, %v506
    %524 = vst.msk [vmem:[#allocation3 + $0x78] sm:$0xff] %vm508, %v507
    // Predicated region
    $region26: #{critic_forward.1} parent=1 // pred_check
      _
    $region27: #{critic_forward.1} parent=1 // pred_check_branch
      %526 = sbr.rel (0) target = $region29
    $region28: #{critic_forward.1} parent=1 // pred_region
      // Predicated region
      $region30: #{critic_forward.1} parent=28 // pred_check
        _
      $region31: #{critic_forward.1} parent=28 // pred_check_branch
        %528 = sbr.rel (0) target = $region33
      $region32: #{critic_forward.1} parent=28 // pred_region
        // Predicated region
        $region34: #{critic_forward.1} parent=32 // pred_check
          _
        $region35: #{critic_forward.1} parent=32 // pred_check_branch
          %530 = sbr.rel (0) target = $region37
        $region36: #{critic_forward.1} parent=32 // pred_region
          // Predicated region
          $region49: #{critic_forward.1} parent=36 // pred_check
            _
          $region50: #{critic_forward.1} parent=36 // pred_check_branch
            %545 = sbr.rel (0) target = $region52
          $region51: #{critic_forward.1} parent=36 // pred_region
            loop: start=0, step=1, limit=1
            $region53: #{critic_forward.1} parent=51 // loop_pre_header
              _
            $region54: #{critic_forward.1} parent=51 // loop_header
              %s547 = sphi 0, %s551
              %p548 = scmp.ge.s32.totalorder %s547, 1
              %s552 = sphi [#allocation3], [#allocation3]
              %s553 = sphi %s6, %s6
            $region55: #{critic_forward.1} parent=51 // loop_header_branch
              %550 = sbr.rel (%p548) target = $region59
            $region56: #{critic_forward.1} parent=51 // loop_body
              %v554 = vld [vmem:[%s552] sm:$0xff]
              %555 = vst [vmem:[%s553] sm:$0xff] %v554
            $region57: #{critic_forward.1} parent=51 // loop_footer
              %s551 = sadd.s32 1, %s547
            $region58: #{critic_forward.1} parent=51 // loop_footer_branch
              %546 = sbr.rel target = $region54
            $region59: #{critic_forward.1} parent=51 // loop_exit
              _
          $region52: #{critic_forward.1} parent=36 // pred_fallthru
            _
          // Predicated region
          $region60: #{critic_forward.1} parent=36 // pred_check
            _
          $region61: #{critic_forward.1} parent=36 // pred_check_branch
            %557 = sbr.rel target = $region63
          $region62: #{critic_forward.1} parent=36 // pred_region
            _
          $region63: #{critic_forward.1} parent=36 // pred_fallthru
            _
        $region37: #{critic_forward.1} parent=32 // pred_fallthru
          _
        // Predicated region
        $region38: #{critic_forward.1} parent=32 // pred_check
          _
        $region39: #{critic_forward.1} parent=32 // pred_check_branch
          %532 = sbr.rel target = $region41
        $region40: #{critic_forward.1} parent=32 // pred_region
          loop: start=0, step=1, limit=1
          $region42: #{critic_forward.1} parent=40 // loop_pre_header
            _
          $region43: #{critic_forward.1} parent=40 // loop_header
            %s535 = sphi 0, %s539
            %p536 = scmp.ge.s32.totalorder %s535, 1
            %s540 = sphi [#allocation3], [#allocation3]
            %s541 = sphi %s6, %s6
          $region44: #{critic_forward.1} parent=40 // loop_header_branch
            %538 = sbr.rel (%p536) target = $region48
          $region45: #{critic_forward.1} parent=40 // loop_body
            %v542 = vld [vmem:[%s540] sm:$0xff]
            %543 = vst [vmem:[%s541] sm:$0xff] %v542
          $region46: #{critic_forward.1} parent=40 // loop_footer
            %s539 = sadd.s32 1, %s535
          $region47: #{critic_forward.1} parent=40 // loop_footer_branch
            %534 = sbr.rel target = $region43
          $region48: #{critic_forward.1} parent=40 // loop_exit
            _
        $region41: #{critic_forward.1} parent=32 // pred_fallthru
          _
      $region33: #{critic_forward.1} parent=28 // pred_fallthru
        _
      %558 = vnop
    $region29: #{critic_forward.1} parent=1 // pred_fallthru
      _
    // Predicated region
    $region64: #{critic_forward.1} parent=1 // pred_check
      _
    $region65: #{critic_forward.1} parent=1 // pred_check_branch
      %560 = sbr.rel (0) target = $region67
    $region66: #{critic_forward.1} parent=1 // pred_region
      _
    $region67: #{critic_forward.1} parent=1 // pred_fallthru
      _

</llo_original>
